<compile_context>
chip_gen: v5e
topology: v5e:2x2
jax: 0.10.0
libtpu: 0.0.40
codegen_flags: <defaults>
</compile_context>

<pallas_src>
import functools

import jax
import jax.numpy as jnp
from jax import lax
from jax.experimental import pallas as pl
from jax.experimental.pallas import tpu as pltpu


def cnn_kernel(x_ref, w_ref, b_ref, o_ref, *, l_out, c_out_pad):
    """One batch tile of Conv1d + ReLU + global max-pool.

    x_ref: (TN, C_in*L)              f32  flat activations (native layout)
    w_ref: (C_in*L, L_out*C_out_pad) bf16 Toeplitz-packed conv weights
    b_ref: (1, C_out_pad)            f32  bias (lane-padded)
    o_ref: (TN, C_out_pad)           f32  pooled output
    """
    x = x_ref[...].astype(jnp.bfloat16)                       # in-VMEM cast (VPU)

    # Entire conv (all K taps, all output positions) as a single MXU matmul.
    y = jnp.dot(x, w_ref[...], preferred_element_type=jnp.float32)
    # y[:, l*C_out_pad + o] == conv output at position l, channel o (f32).

    # Global max over L: 128-lane-aligned slices, pure VPU maxima (no relayout).
    m = y[:, 0:c_out_pad]
    for l in range(1, l_out):
        m = jnp.maximum(m, y[:, l * c_out_pad:(l + 1) * c_out_pad])

    # Bias + ReLU only on the pooled (TN, C_out_pad) tile.
    # Exact reorder: max_L(relu(conv + b)) == relu(max_L(conv) + b).
    o_ref[...] = jnp.maximum(m + b_ref[...], 0.0).astype(o_ref.dtype)


def cnn_forward(x, weight, bias, *, tile_n=512):
    """x: (N, C_in, L) f32; weight: (C_out, C_in, K); bias: (C_out,) -> (N, C_out).

    tile_n: batch rows per grid step (multiple of 8 when n > tile_n).  The
    per-step VMEM footprint is ~ tile_n * L_out * 512 B (f32 matmul result)
    plus the small resident weight, so tile_n in the 256-1024 range is safe on
    v5e/v6e/v7x without raising vmem_limit_bytes.  For v7x prefer a tile_n
    that gives >= 2 (ideally >= 4) grid steps so both TensorCores are used.
    """
    n, c_in, length = x.shape
    c_out, _, k = weight.shape
    l_out = length - k + 1
    assert l_out >= 1, "sequence length must be >= kernel_size"

    c_out_pad = pl.cdiv(c_out, 128) * 128          # lane-dense output stores

    # ---- Toeplitz-packed weight (built once, tiny, stays VMEM-resident) ----
    # w_big[c*L + p, l*C_out_pad + o] = weight[o, c, p - l]  if 0 <= p-l < K
    p_idx = jnp.arange(length)[:, None]            # (L, 1)
    l_idx = jnp.arange(l_out)[None, :]             # (1, L_out)
    kk = p_idx - l_idx                             # (L, L_out)
    valid = (kk >= 0) & (kk < k)
    kk_c = jnp.clip(kk, 0, k - 1)
    w_g = jnp.transpose(weight, (1, 2, 0))[:, kk_c, :]        # (C_in, L, L_out, C_out)
    w_g = jnp.where(valid[None, :, :, None], w_g.astype(jnp.float32), 0.0)
    w_big = jnp.zeros((c_in, length, l_out, c_out_pad), jnp.float32)
    w_big = w_big.at[..., :c_out].set(w_g)
    w_big = w_big.reshape(c_in * length, l_out * c_out_pad).astype(jnp.bfloat16)

    b2d = jnp.zeros((1, c_out_pad), jnp.float32).at[0, :c_out].set(
        bias.astype(jnp.float32))

    # Native layout, free contiguous reshape -- no transpose/cast/pad HBM pass.
    x_flat = x.reshape(n, c_in * length)

    # Batch tiling: single full block for small batches, cdiv grid otherwise.
    if n <= tile_n:
        tile = n
    else:
        assert tile_n % 8 == 0, "tile_n must be a multiple of 8"
        tile = tile_n
    n_blocks = pl.cdiv(n, tile)
    n_out = n_blocks * tile

    kernel = functools.partial(cnn_kernel, l_out=l_out, c_out_pad=c_out_pad)

    out = pl.pallas_call(
        kernel,
        out_shape=jax.ShapeDtypeStruct((n_out, c_out_pad), jnp.float32),
        grid_spec=pl.GridSpec(
            grid=(n_blocks,),
            in_specs=[
                pl.BlockSpec((tile, c_in * length), lambda i: (i, 0)),
                # weights / bias stay VMEM-resident across all grid steps
                pl.BlockSpec((c_in * length, l_out * c_out_pad), lambda i: (0, 0)),
                pl.BlockSpec((1, c_out_pad), lambda i: (0, 0)),
            ],
            out_specs=pl.BlockSpec((tile, c_out_pad), lambda i: (i, 0)),
        ),
        compiler_params=pltpu.CompilerParams(
            dimension_semantics=("parallel",),   # shards batch across v7x's 2 TCs
        ),
    )(x_flat, w_big, b2d)

    return out[:n, :c_out]


def reference_forward(x, weight, bias):
    """Pure-JAX reference matching torch Conv1d + ReLU + MaxPool1d + squeeze."""
    conv = lax.conv_general_dilated(
        x, weight, window_strides=(1,), padding='VALID',
        dimension_numbers=('NCH', 'OIH', 'NCH'))
    conv = conv + bias[None, :, None]
    relu = jnp.maximum(conv, 0.0)
    return jnp.max(relu, axis=2)


if __name__ == "__main__":
    # Small shapes implied by the module: char-CNN over words.
    batch = 2
    in_channels = 4          # char embedding dim
    out_channels = 32        # number of filters
    max_word_length = 16     # sequence length L
    kernel_size = 3

    key = jax.random.PRNGKey(0)
    kx, kw, kb = jax.random.split(key, 3)

    x = jax.random.normal(kx, (batch, in_channels, max_word_length),
                          dtype=jnp.float32)
    fan_in = in_channels * kernel_size
    bound = 1.0 / (fan_in ** 0.5)
    weight = jax.random.uniform(kw, (out_channels, in_channels, kernel_size),
                                minval=-bound, maxval=bound, dtype=jnp.float32)
    bias = jax.random.uniform(kb, (out_channels,), minval=-bound, maxval=bound,
                              dtype=jnp.float32)

    out = cnn_forward(x, weight, bias)
    out = jax.block_until_ready(out)
    assert out.shape == (batch, out_channels)

    # Exact-path check: reference over the same bf16-quantized inputs.
    x_q = x.astype(jnp.bfloat16).astype(jnp.float32)
    w_q = weight.astype(jnp.bfloat16).astype(jnp.float32)
    ref_q = reference_forward(x_q, w_q, bias)
    assert jnp.allclose(out, ref_q, atol=1e-3, rtol=1e-3)

    # Fidelity to the full-precision module output (bf16 input quantization only).
    ref = reference_forward(x, weight, bias)
    assert jnp.allclose(out, ref, atol=5e-2, rtol=5e-2)

    print("KERNEL_OK")
</pallas_src>

<mosaic_0001>
module attributes {stable_mosaic.version = 11 : i64} {
  func.func @cnn_kernel(%arg0: i32, %arg1: memref<2x64xf32, #tpu.memory_space<vmem>>, %arg2: memref<64x1792xbf16, #tpu.memory_space<vmem>>, %arg3: memref<1x128xf32, #tpu.memory_space<vmem>>, %arg4: memref<2x128xf32, #tpu.memory_space<vmem>>) attributes {dimension_semantics = [#tpu.dimension_semantics<parallel>], iteration_bounds = array<i64: 1>, scalar_prefetch = 0 : i64, scratch_operands = 0 : i64, tpu.core_type = #tpu.core_type<tc>, window_params = [{transform_indices = @transform_0, window_bounds = array<i64: 2, 64>}, {pipeline_mode = #tpu.pipeline_mode<synchronous>, transform_indices = @transform_1, window_bounds = array<i64: 64, 1792>}, {pipeline_mode = #tpu.pipeline_mode<synchronous>, transform_indices = @transform_2, window_bounds = array<i64: 1, 128>}, {transform_indices = @transform_3, window_bounds = array<i64: 2, 128>}]} {
    %c0 = arith.constant 0 : index
    %c0_0 = arith.constant 0 : index
    %0 = vector.load %arg1[%c0, %c0_0] : memref<2x64xf32, #tpu.memory_space<vmem>>, vector<2x64xf32>
    %1 = arith.truncf %0 : vector<2x64xf32> to vector<2x64xbf16>
    %c0_1 = arith.constant 0 : index
    %c0_2 = arith.constant 0 : index
    %2 = vector.load %arg2[%c0_1, %c0_2] : memref<64x1792xbf16, #tpu.memory_space<vmem>>, vector<64x1792xbf16>
    %cst = arith.constant dense<0.000000e+00> : vector<2x1792xf32>
    %3 = tpu.matmul %1, %2, %cst {dimension_numbers = #tpu.dot_dimension_numbers<[1], [0], [0], [1], [0, 0, 1, 1], [], []>} : vector<2x64xbf16>, vector<64x1792xbf16>, vector<2x1792xf32> -> vector<2x1792xf32>
    %4 = vector.extract_strided_slice %3 {offsets = [0, 0], sizes = [2, 128], strides = [1, 1]} : vector<2x1792xf32> to vector<2x128xf32>
    %5 = vector.extract_strided_slice %3 {offsets = [0, 128], sizes = [2, 128], strides = [1, 1]} : vector<2x1792xf32> to vector<2x128xf32>
    %6 = arith.maximumf %4, %5 : vector<2x128xf32>
    %7 = vector.extract_strided_slice %3 {offsets = [0, 256], sizes = [2, 128], strides = [1, 1]} : vector<2x1792xf32> to vector<2x128xf32>
    %8 = arith.maximumf %6, %7 : vector<2x128xf32>
    %9 = vector.extract_strided_slice %3 {offsets = [0, 384], sizes = [2, 128], strides = [1, 1]} : vector<2x1792xf32> to vector<2x128xf32>
    %10 = arith.maximumf %8, %9 : vector<2x128xf32>
    %11 = vector.extract_strided_slice %3 {offsets = [0, 512], sizes = [2, 128], strides = [1, 1]} : vector<2x1792xf32> to vector<2x128xf32>
    %12 = arith.maximumf %10, %11 : vector<2x128xf32>
    %13 = vector.extract_strided_slice %3 {offsets = [0, 640], sizes = [2, 128], strides = [1, 1]} : vector<2x1792xf32> to vector<2x128xf32>
    %14 = arith.maximumf %12, %13 : vector<2x128xf32>
    %15 = vector.extract_strided_slice %3 {offsets = [0, 768], sizes = [2, 128], strides = [1, 1]} : vector<2x1792xf32> to vector<2x128xf32>
    %16 = arith.maximumf %14, %15 : vector<2x128xf32>
    %17 = vector.extract_strided_slice %3 {offsets = [0, 896], sizes = [2, 128], strides = [1, 1]} : vector<2x1792xf32> to vector<2x128xf32>
    %18 = arith.maximumf %16, %17 : vector<2x128xf32>
    %19 = vector.extract_strided_slice %3 {offsets = [0, 1024], sizes = [2, 128], strides = [1, 1]} : vector<2x1792xf32> to vector<2x128xf32>
    %20 = arith.maximumf %18, %19 : vector<2x128xf32>
    %21 = vector.extract_strided_slice %3 {offsets = [0, 1152], sizes = [2, 128], strides = [1, 1]} : vector<2x1792xf32> to vector<2x128xf32>
    %22 = arith.maximumf %20, %21 : vector<2x128xf32>
    %23 = vector.extract_strided_slice %3 {offsets = [0, 1280], sizes = [2, 128], strides = [1, 1]} : vector<2x1792xf32> to vector<2x128xf32>
    %24 = arith.maximumf %22, %23 : vector<2x128xf32>
    %25 = vector.extract_strided_slice %3 {offsets = [0, 1408], sizes = [2, 128], strides = [1, 1]} : vector<2x1792xf32> to vector<2x128xf32>
    %26 = arith.maximumf %24, %25 : vector<2x128xf32>
    %27 = vector.extract_strided_slice %3 {offsets = [0, 1536], sizes = [2, 128], strides = [1, 1]} : vector<2x1792xf32> to vector<2x128xf32>
    %28 = arith.maximumf %26, %27 : vector<2x128xf32>
    %29 = vector.extract_strided_slice %3 {offsets = [0, 1664], sizes = [2, 128], strides = [1, 1]} : vector<2x1792xf32> to vector<2x128xf32>
    %30 = arith.maximumf %28, %29 : vector<2x128xf32>
    %c0_3 = arith.constant 0 : index
    %c0_4 = arith.constant 0 : index
    %31 = vector.load %arg3[%c0_3, %c0_4] : memref<1x128xf32, #tpu.memory_space<vmem>>, vector<1x128xf32>
    %32 = vector.broadcast %31 : vector<1x128xf32> to vector<2x128xf32>
    %33 = arith.addf %30, %32 : vector<2x128xf32>
    %cst_5 = arith.constant 0.000000e+00 : f32
    %34 = vector.broadcast %cst_5 : f32 to vector<2x128xf32>
    %35 = arith.maximumf %33, %34 : vector<2x128xf32>
    %c0_6 = arith.constant 0 : index
    %c0_7 = arith.constant 0 : index
    %36 = vector.load %arg4[%c0_6, %c0_7] : memref<2x128xf32, #tpu.memory_space<vmem>>, vector<2x128xf32>
    tpu.vector_store %arg4[%c0_6, %c0_7], %35 {strides = array<i32>} : memref<2x128xf32, #tpu.memory_space<vmem>>, vector<2x128xf32>,
    return
  }
  func.func @transform_0(%arg0: i32) -> (i32, i32) {
    %c0_i32 = arith.constant 0 : i32
    %c0_i32_0 = arith.constant 0 : i32
    return %arg0, %c0_i32 : i32, i32
  }
  func.func @transform_1(%arg0: i32) -> (i32, i32) {
    %c0_i32 = arith.constant 0 : i32
    %c0_i32_0 = arith.constant 0 : i32
    %c0_i32_1 = arith.constant 0 : i32
    return %c0_i32, %c0_i32_0 : i32, i32
  }
  func.func @transform_2(%arg0: i32) -> (i32, i32) {
    %c0_i32 = arith.constant 0 : i32
    %c0_i32_0 = arith.constant 0 : i32
    %c0_i32_1 = arith.constant 0 : i32
    return %c0_i32, %c0_i32_0 : i32, i32
  }
  func.func @transform_3(%arg0: i32) -> (i32, i32) {
    %c0_i32 = arith.constant 0 : i32
    %c0_i32_0 = arith.constant 0 : i32
    return %arg0, %c0_i32 : i32, i32
  }
}

</mosaic_0001>

<llo_original>
// kernel: tpu_custom_call.1
$region0: #{tpu_custom_call.1}
  #allocation0 [shape = 'u32[]', space=smem, size = 0x4, offset = 0x4, fixed_abs, tag = 'smem constant byte address 0x4 - core index']
  #allocation1 [shape = 'u32[72,128]{1,0:T(1,128)}', space=vmem, size = 0x9000, scoped, tag = 'internal scratch']
  %s0 = inlined_call_operand.hbm [shape: f32[2,64], index: 0, kind: input, shape index: {}]
  %s1 = inlined_call_operand.hbm [shape: bf16[64,1792], index: 1, kind: input, shape index: {}]
  %s2 = inlined_call_operand.vmem [shape: f32[1,128], index: 2, kind: input, shape index: {}]
  %s3 = inlined_call_operand.hbm [shape: f32[2,128], index: 3, kind: output, shape index: {}]
  %s4 = sld [smem:[#allocation0]]
  $region30: #{tpu_custom_call.1} parent=0
    _
  %s6 = ssub.s32 1, %s4
  %s7 = scalar_select 0, %s6, %s4
  $region1: #{tpu_custom_call.1} parent=0
    #allocation2 [shape = 'u8[1024]{0}', space=vmem, size = 0x400, scoped, tag = 'input window, operand 0, single buffered']
    #allocation3 [shape = 's32[1]{0}', space=sflag, size = 0x4, scoped, tag = 'scoped memory for tpu_custom_call.1']
    #allocation4 [shape = 's32[1]{0}', space=sflag, size = 0x4, scoped, tag = 'scoped memory for tpu_custom_call.1']
    #allocation5 [shape = 'u8[229376]{0}', space=vmem, size = 0x38000, scoped, tag = 'input window, operand 1, single buffered']
    #allocation6 [shape = 's32[1]{0}', space=sflag, size = 0x4, scoped, tag = 'scoped memory for tpu_custom_call.1']
    #allocation7 [shape = 'u8[1024]{0}', space=vmem, size = 0x400, scoped, tag = 'output window, operand 0, single buffered']
    %8 = vsyncpa [#allocation3], 0
    %9 = vsyncpa [#allocation6], 0
    %10 = vsyncpa [#allocation4], 0
    // Predicated region
    $region2: #{tpu_custom_call.1} parent=1 // pred_check
      _
    $region3: #{tpu_custom_call.1} parent=1 // pred_check_branch
      %12 = sbr.rel (0) target = $region5
    $region4: #{tpu_custom_call.1} parent=1 // pred_region
      %14 = vsyncadd [#allocation3], 0
      %s16 = sshll.u32 %s0, 4
      %s17 = int_to_ptr.hbm [resolvable:$true] %s16
      %s18 = sshll.u32 [#allocation2], 4
      %s19 = int_to_ptr.vmem [resolvable:$true] %s18
      %21 = dma.hbm_to_vmem [thread:$0]  %s17, 32, %s19, [#allocation3]
    $region5: #{tpu_custom_call.1} parent=1 // pred_fallthru
      _
    // Predicated region
    $region6: #{tpu_custom_call.1} parent=1 // pred_check
      _
    $region7: #{tpu_custom_call.1} parent=1 // pred_check_branch
      %23 = sbr.rel (0) target = $region9
    $region8: #{tpu_custom_call.1} parent=1 // pred_region
      %25 = vsyncadd [#allocation6], 0
      %s26 = sshll.u32 %s1, 4
      %s27 = int_to_ptr.hbm [resolvable:$true] %s26
      %s28 = sshll.u32 [#allocation5], 4
      %s29 = int_to_ptr.vmem [resolvable:$true] %s28
      %34 = dma.hbm_to_vmem [thread:$0]  %s27, 7168, %s29, [#allocation6], 896, 896, 56
    $region9: #{tpu_custom_call.1} parent=1 // pred_fallthru
      _
    // Predicated region
    $region10: #{tpu_custom_call.1} parent=1 // pred_check
      _
    $region11: #{tpu_custom_call.1} parent=1 // pred_check_branch
      %36 = sbr.rel (0) target = $region13
    $region12: #{tpu_custom_call.1} parent=1 // pred_region
      _
    $region13: #{tpu_custom_call.1} parent=1 // pred_fallthru
      _
    // Predicated region
    $region14: #{tpu_custom_call.1} parent=1 // pred_check
      _
    $region15: #{tpu_custom_call.1} parent=1 // pred_check_branch
      %38 = sbr.rel (0) target = $region17
    $region16: #{tpu_custom_call.1} parent=1 // pred_region
      %40 = dma.done [#allocation3], 32
    $region17: #{tpu_custom_call.1} parent=1 // pred_fallthru
      _
    // Predicated region
    $region18: #{tpu_custom_call.1} parent=1 // pred_check
      _
    $region19: #{tpu_custom_call.1} parent=1 // pred_check_branch
      %42 = sbr.rel (0) target = $region21
    $region20: #{tpu_custom_call.1} parent=1 // pred_region
      %44 = dma.done [#allocation6], 7168
    $region21: #{tpu_custom_call.1} parent=1 // pred_fallthru
      _
    %v46 = vld [vmem:[#allocation2] sm:$0x3]
    %v47 = vpack.c.bf16 %v46, %v46
    %v48 = vld [vmem:[#allocation5] sm:$0xff]
    %v49 = vld [vmem:[#allocation5 + $0x8] sm:$0xff]
    %v50 = vld [vmem:[#allocation5 + $0x10] sm:$0xff]
    %v51 = vld [vmem:[#allocation5 + $0x18] sm:$0xff]
    %v52 = vld [vmem:[#allocation5 + $0x20] sm:$0xff]
    %v53 = vld [vmem:[#allocation5 + $0x28] sm:$0xff]
    %v54 = vld [vmem:[#allocation5 + $0x30] sm:$0xff]
    %v55 = vld [vmem:[#allocation5 + $0x38] sm:$0xff]
    %v56 = vld [vmem:[#allocation5 + $0x40] sm:$0xff]
    %v57 = vld [vmem:[#allocation5 + $0x48] sm:$0xff]
    %v58 = vld [vmem:[#allocation5 + $0x50] sm:$0xff]
    %v59 = vld [vmem:[#allocation5 + $0x58] sm:$0xff]
    %v60 = vld [vmem:[#allocation5 + $0x60] sm:$0xff]
    %v61 = vld [vmem:[#allocation5 + $0x68] sm:$0xff]
    %v62 = vld [vmem:[#allocation5 + $0x70] sm:$0xff]
    %v63 = vld [vmem:[#allocation5 + $0x78] sm:$0xff]
    %v64 = vld [vmem:[#allocation5 + $0x80] sm:$0xff]
    %v65 = vld [vmem:[#allocation5 + $0x88] sm:$0xff]
    %v66 = vld [vmem:[#allocation5 + $0x90] sm:$0xff]
    %v67 = vld [vmem:[#allocation5 + $0x98] sm:$0xff]
    %v68 = vld [vmem:[#allocation5 + $0xa0] sm:$0xff]
    %v69 = vld [vmem:[#allocation5 + $0xa8] sm:$0xff]
    %v70 = vld [vmem:[#allocation5 + $0xb0] sm:$0xff]
    %v71 = vld [vmem:[#allocation5 + $0xb8] sm:$0xff]
    %v72 = vld [vmem:[#allocation5 + $0xc0] sm:$0xff]
    %v73 = vld [vmem:[#allocation5 + $0xc8] sm:$0xff]
    %v74 = vld [vmem:[#allocation5 + $0xd0] sm:$0xff]
    %v75 = vld [vmem:[#allocation5 + $0xd8] sm:$0xff]
    %v76 = vld [vmem:[#allocation5 + $0xe0] sm:$0xff]
    %v77 = vld [vmem:[#allocation5 + $0xe8] sm:$0xff]
    %v78 = vld [vmem:[#allocation5 + $0xf0] sm:$0xff]
    %v79 = vld [vmem:[#allocation5 + $0xf8] sm:$0xff]
    %v80 = vld [vmem:[#allocation5 + $0x100] sm:$0xff]
    %v81 = vld [vmem:[#allocation5 + $0x108] sm:$0xff]
    %v82 = vld [vmem:[#allocation5 + $0x110] sm:$0xff]
    %v83 = vld [vmem:[#allocation5 + $0x118] sm:$0xff]
    %v84 = vld [vmem:[#allocation5 + $0x120] sm:$0xff]
    %v85 = vld [vmem:[#allocation5 + $0x128] sm:$0xff]
    %v86 = vld [vmem:[#allocation5 + $0x130] sm:$0xff]
    %v87 = vld [vmem:[#allocation5 + $0x138] sm:$0xff]
    %v88 = vld [vmem:[#allocation5 + $0x140] sm:$0xff]
    %v89 = vld [vmem:[#allocation5 + $0x148] sm:$0xff]
    %v90 = vld [vmem:[#allocation5 + $0x150] sm:$0xff]
    %v91 = vld [vmem:[#allocation5 + $0x158] sm:$0xff]
    %v92 = vld [vmem:[#allocation5 + $0x160] sm:$0xff]
    %v93 = vld [vmem:[#allocation5 + $0x168] sm:$0xff]
    %v94 = vld [vmem:[#allocation5 + $0x170] sm:$0xff]
    %v95 = vld [vmem:[#allocation5 + $0x178] sm:$0xff]
    %v96 = vld [vmem:[#allocation5 + $0x180] sm:$0xff]
    %v97 = vld [vmem:[#allocation5 + $0x188] sm:$0xff]
    %v98 = vld [vmem:[#allocation5 + $0x190] sm:$0xff]
    %v99 = vld [vmem:[#allocation5 + $0x198] sm:$0xff]
    %v100 = vld [vmem:[#allocation5 + $0x1a0] sm:$0xff]
    %v101 = vld [vmem:[#allocation5 + $0x1a8] sm:$0xff]
    %v102 = vld [vmem:[#allocation5 + $0x1b0] sm:$0xff]
    %v103 = vld [vmem:[#allocation5 + $0x1b8] sm:$0xff]
    %v160 = vunpack.c.l.b16 %v48
    %v161 = vunpack.c.h.b16 %v48
    %v162 = vunpack.c.l.b16 %v49
    %v163 = vunpack.c.h.b16 %v49
    %v164 = vunpack.c.l.b16 %v50
    %v165 = vunpack.c.h.b16 %v50
    %v166 = vunpack.c.l.b16 %v51
    %v167 = vunpack.c.h.b16 %v51
    %v168 = vunpack.c.l.b16 %v52
    %v169 = vunpack.c.h.b16 %v52
    %v170 = vunpack.c.l.b16 %v53
    %v171 = vunpack.c.h.b16 %v53
    %v172 = vunpack.c.l.b16 %v54
    %v173 = vunpack.c.h.b16 %v54
    %v174 = vunpack.c.l.b16 %v55
    %v175 = vunpack.c.h.b16 %v55
    %v176 = vunpack.c.l.b16 %v56
    %v177 = vunpack.c.h.b16 %v56
    %v178 = vunpack.c.l.b16 %v57
    %v179 = vunpack.c.h.b16 %v57
    %v180 = vunpack.c.l.b16 %v58
    %v181 = vunpack.c.h.b16 %v58
    %v182 = vunpack.c.l.b16 %v59
    %v183 = vunpack.c.h.b16 %v59
    %v184 = vunpack.c.l.b16 %v60
    %v185 = vunpack.c.h.b16 %v60
    %v186 = vunpack.c.l.b16 %v61
    %v187 = vunpack.c.h.b16 %v61
    %v188 = vunpack.c.l.b16 %v62
    %v189 = vunpack.c.h.b16 %v62
    %v190 = vunpack.c.l.b16 %v63
    %v191 = vunpack.c.h.b16 %v63
    %v192 = vunpack.c.l.b16 %v64
    %v193 = vunpack.c.h.b16 %v64
    %v194 = vunpack.c.l.b16 %v65
    %v195 = vunpack.c.h.b16 %v65
    %v196 = vunpack.c.l.b16 %v66
    %v197 = vunpack.c.h.b16 %v66
    %v198 = vunpack.c.l.b16 %v67
    %v199 = vunpack.c.h.b16 %v67
    %v200 = vunpack.c.l.b16 %v68
    %v201 = vunpack.c.h.b16 %v68
    %v202 = vunpack.c.l.b16 %v69
    %v203 = vunpack.c.h.b16 %v69
    %v204 = vunpack.c.l.b16 %v70
    %v205 = vunpack.c.h.b16 %v70
    %v206 = vunpack.c.l.b16 %v71
    %v207 = vunpack.c.h.b16 %v71
    %v208 = vunpack.c.l.b16 %v72
    %v209 = vunpack.c.h.b16 %v72
    %v210 = vunpack.c.l.b16 %v73
    %v211 = vunpack.c.h.b16 %v73
    %v212 = vunpack.c.l.b16 %v74
    %v213 = vunpack.c.h.b16 %v74
    %v214 = vunpack.c.l.b16 %v75
    %v215 = vunpack.c.h.b16 %v75
    %v216 = vunpack.c.l.b16 %v76
    %v217 = vunpack.c.h.b16 %v76
    %v218 = vunpack.c.l.b16 %v77
    %v219 = vunpack.c.h.b16 %v77
    %v220 = vunpack.c.l.b16 %v78
    %v221 = vunpack.c.h.b16 %v78
    %v222 = vunpack.c.l.b16 %v79
    %v223 = vunpack.c.h.b16 %v79
    %v224 = vunpack.c.l.b16 %v80
    %v225 = vunpack.c.h.b16 %v80
    %v226 = vunpack.c.l.b16 %v81
    %v227 = vunpack.c.h.b16 %v81
    %v228 = vunpack.c.l.b16 %v82
    %v229 = vunpack.c.h.b16 %v82
    %v230 = vunpack.c.l.b16 %v83
    %v231 = vunpack.c.h.b16 %v83
    %v232 = vunpack.c.l.b16 %v84
    %v233 = vunpack.c.h.b16 %v84
    %v234 = vunpack.c.l.b16 %v85
    %v235 = vunpack.c.h.b16 %v85
    %v236 = vunpack.c.l.b16 %v86
    %v237 = vunpack.c.h.b16 %v86
    %v238 = vunpack.c.l.b16 %v87
    %v239 = vunpack.c.h.b16 %v87
    %v240 = vunpack.c.l.b16 %v88
    %v241 = vunpack.c.h.b16 %v88
    %v242 = vunpack.c.l.b16 %v89
    %v243 = vunpack.c.h.b16 %v89
    %v244 = vunpack.c.l.b16 %v90
    %v245 = vunpack.c.h.b16 %v90
    %v246 = vunpack.c.l.b16 %v91
    %v247 = vunpack.c.h.b16 %v91
    %v248 = vunpack.c.l.b16 %v92
    %v249 = vunpack.c.h.b16 %v92
    %v250 = vunpack.c.l.b16 %v93
    %v251 = vunpack.c.h.b16 %v93
    %v252 = vunpack.c.l.b16 %v94
    %v253 = vunpack.c.h.b16 %v94
    %v254 = vunpack.c.l.b16 %v95
    %v255 = vunpack.c.h.b16 %v95
    %v256 = vunpack.c.l.b16 %v96
    %v257 = vunpack.c.h.b16 %v96
    %v258 = vunpack.c.l.b16 %v97
    %v259 = vunpack.c.h.b16 %v97
    %v260 = vunpack.c.l.b16 %v98
    %v261 = vunpack.c.h.b16 %v98
    %v262 = vunpack.c.l.b16 %v99
    %v263 = vunpack.c.h.b16 %v99
    %v264 = vunpack.c.l.b16 %v100
    %v265 = vunpack.c.h.b16 %v100
    %v266 = vunpack.c.l.b16 %v101
    %v267 = vunpack.c.h.b16 %v101
    %v268 = vunpack.c.l.b16 %v102
    %v269 = vunpack.c.h.b16 %v102
    %v270 = vunpack.c.l.b16 %v103
    %v271 = vunpack.c.h.b16 %v103
    %v272 = vpack.c.b16 %v174, %v160
    %v273 = vpack.c.b16 %v175, %v161
    %v274 = vpack.c.b16 %v176, %v162
    %v275 = vpack.c.b16 %v177, %v163
    %v276 = vpack.c.b16 %v178, %v164
    %v277 = vpack.c.b16 %v179, %v165
    %v278 = vpack.c.b16 %v180, %v166
    %v279 = vpack.c.b16 %v181, %v167
    %v280 = vpack.c.b16 %v182, %v168
    %v281 = vpack.c.b16 %v183, %v169
    %v282 = vpack.c.b16 %v184, %v170
    %v283 = vpack.c.b16 %v185, %v171
    %v284 = vpack.c.b16 %v186, %v172
    %v285 = vpack.c.b16 %v187, %v173
    %v286 = vpack.c.b16 %v202, %v188
    %v287 = vpack.c.b16 %v203, %v189
    %v288 = vpack.c.b16 %v204, %v190
    %v289 = vpack.c.b16 %v205, %v191
    %v290 = vpack.c.b16 %v206, %v192
    %v291 = vpack.c.b16 %v207, %v193
    %v292 = vpack.c.b16 %v208, %v194
    %v293 = vpack.c.b16 %v209, %v195
    %v294 = vpack.c.b16 %v210, %v196
    %v295 = vpack.c.b16 %v211, %v197
    %v296 = vpack.c.b16 %v212, %v198
    %v297 = vpack.c.b16 %v213, %v199
    %v298 = vpack.c.b16 %v214, %v200
    %v299 = vpack.c.b16 %v215, %v201
    %v300 = vpack.c.b16 %v230, %v216
    %v301 = vpack.c.b16 %v231, %v217
    %v302 = vpack.c.b16 %v232, %v218
    %v303 = vpack.c.b16 %v233, %v219
    %v304 = vpack.c.b16 %v234, %v220
    %v305 = vpack.c.b16 %v235, %v221
    %v306 = vpack.c.b16 %v236, %v222
    %v307 = vpack.c.b16 %v237, %v223
    %v308 = vpack.c.b16 %v238, %v224
    %v309 = vpack.c.b16 %v239, %v225
    %v310 = vpack.c.b16 %v240, %v226
    %v311 = vpack.c.b16 %v241, %v227
    %v312 = vpack.c.b16 %v242, %v228
    %v313 = vpack.c.b16 %v243, %v229
    %v314 = vpack.c.b16 %v258, %v244
    %v315 = vpack.c.b16 %v259, %v245
    %v316 = vpack.c.b16 %v260, %v246
    %v317 = vpack.c.b16 %v261, %v247
    %v318 = vpack.c.b16 %v262, %v248
    %v319 = vpack.c.b16 %v263, %v249
    %v320 = vpack.c.b16 %v264, %v250
    %v321 = vpack.c.b16 %v265, %v251
    %v322 = vpack.c.b16 %v266, %v252
    %v323 = vpack.c.b16 %v267, %v253
    %v324 = vpack.c.b16 %v268, %v254
    %v325 = vpack.c.b16 %v269, %v255
    %v326 = vpack.c.b16 %v270, %v256
    %v327 = vpack.c.b16 %v271, %v257
    %vm384 = vcmask 523264
    %v386 = vsel %vm384, %v47, 0
    %388 = vmatpush.bf16.msra.mxu0 0
    %389 = vmatpush.bf16.msra.mxu0 0
    %390 = vmatpush.bf16.msra.mxu0 0
    %391 = vmatpush.bf16.msra.mxu0 0
    %392 = vmatpush.bf16.msra.mxu0 %v314
    %393 = vmatpush.bf16.msra.mxu0 %v300
    %394 = vmatpush.bf16.msra.mxu0 %v286
    %395 = vmatpush.bf16.msra.mxu0 %v272
    %396 = vmatmul.bf16.gmra.mxu0 %v386
    %v397 = vpop.f32.mrf.mxu0
    %v398 = vadd.f32 0.0, %v397
    %v399 = vpop.f32.mrf.mxu0
    %400 = vdwg.mxu0
    %401 = vmatpush.bf16.msra.mxu0 0
    %402 = vmatpush.bf16.msra.mxu0 0
    %403 = vmatpush.bf16.msra.mxu0 0
    %404 = vmatpush.bf16.msra.mxu0 0
    %405 = vmatpush.bf16.msra.mxu0 %v315
    %406 = vmatpush.bf16.msra.mxu0 %v301
    %407 = vmatpush.bf16.msra.mxu0 %v287
    %408 = vmatpush.bf16.msra.mxu0 %v273
    %409 = vmatmul.bf16.gmra.mxu0 %v386
    %v410 = vpop.f32.mrf.mxu0
    %v411 = vadd.f32 0.0, %v410
    %v412 = vpop.f32.mrf.mxu0
    %413 = vdwg.mxu0
    %414 = vmatpush.bf16.msra.mxu0 0
    %415 = vmatpush.bf16.msra.mxu0 0
    %416 = vmatpush.bf16.msra.mxu0 0
    %417 = vmatpush.bf16.msra.mxu0 0
    %418 = vmatpush.bf16.msra.mxu0 %v316
    %419 = vmatpush.bf16.msra.mxu0 %v302
    %420 = vmatpush.bf16.msra.mxu0 %v288
    %421 = vmatpush.bf16.msra.mxu0 %v274
    %422 = vmatmul.bf16.gmra.mxu0 %v386
    %v423 = vpop.f32.mrf.mxu0
    %v424 = vadd.f32 0.0, %v423
    %v425 = vpop.f32.mrf.mxu0
    %426 = vdwg.mxu0
    %427 = vmatpush.bf16.msra.mxu0 0
    %428 = vmatpush.bf16.msra.mxu0 0
    %429 = vmatpush.bf16.msra.mxu0 0
    %430 = vmatpush.bf16.msra.mxu0 0
    %431 = vmatpush.bf16.msra.mxu0 %v317
    %432 = vmatpush.bf16.msra.mxu0 %v303
    %433 = vmatpush.bf16.msra.mxu0 %v289
    %434 = vmatpush.bf16.msra.mxu0 %v275
    %435 = vmatmul.bf16.gmra.mxu0 %v386
    %v436 = vpop.f32.mrf.mxu0
    %v437 = vadd.f32 0.0, %v436
    %v438 = vpop.f32.mrf.mxu0
    %439 = vdwg.mxu0
    %440 = vmatpush.bf16.msra.mxu0 0
    %441 = vmatpush.bf16.msra.mxu0 0
    %442 = vmatpush.bf16.msra.mxu0 0
    %443 = vmatpush.bf16.msra.mxu0 0
    %444 = vmatpush.bf16.msra.mxu0 %v318
    %445 = vmatpush.bf16.msra.mxu0 %v304
    %446 = vmatpush.bf16.msra.mxu0 %v290
    %447 = vmatpush.bf16.msra.mxu0 %v276
    %448 = vmatmul.bf16.gmra.mxu0 %v386
    %v449 = vpop.f32.mrf.mxu0
    %v450 = vadd.f32 0.0, %v449
    %v451 = vpop.f32.mrf.mxu0
    %452 = vdwg.mxu0
    %453 = vmatpush.bf16.msra.mxu0 0
    %454 = vmatpush.bf16.msra.mxu0 0
    %455 = vmatpush.bf16.msra.mxu0 0
    %456 = vmatpush.bf16.msra.mxu0 0
    %457 = vmatpush.bf16.msra.mxu0 %v319
    %458 = vmatpush.bf16.msra.mxu0 %v305
    %459 = vmatpush.bf16.msra.mxu0 %v291
    %460 = vmatpush.bf16.msra.mxu0 %v277
    %461 = vmatmul.bf16.gmra.mxu0 %v386
    %v462 = vpop.f32.mrf.mxu0
    %v463 = vadd.f32 0.0, %v462
    %v464 = vpop.f32.mrf.mxu0
    %465 = vdwg.mxu0
    %466 = vmatpush.bf16.msra.mxu0 0
    %467 = vmatpush.bf16.msra.mxu0 0
    %468 = vmatpush.bf16.msra.mxu0 0
    %469 = vmatpush.bf16.msra.mxu0 0
    %470 = vmatpush.bf16.msra.mxu0 %v320
    %471 = vmatpush.bf16.msra.mxu0 %v306
    %472 = vmatpush.bf16.msra.mxu0 %v292
    %473 = vmatpush.bf16.msra.mxu0 %v278
    %474 = vmatmul.bf16.gmra.mxu0 %v386
    %v475 = vpop.f32.mrf.mxu0
    %v476 = vadd.f32 0.0, %v475
    %v477 = vpop.f32.mrf.mxu0
    %478 = vdwg.mxu0
    %479 = vmatpush.bf16.msra.mxu0 0
    %480 = vmatpush.bf16.msra.mxu0 0
    %481 = vmatpush.bf16.msra.mxu0 0
    %482 = vmatpush.bf16.msra.mxu0 0
    %483 = vmatpush.bf16.msra.mxu0 %v321
    %484 = vmatpush.bf16.msra.mxu0 %v307
    %485 = vmatpush.bf16.msra.mxu0 %v293
    %486 = vmatpush.bf16.msra.mxu0 %v279
    %487 = vmatmul.bf16.gmra.mxu0 %v386
    %v488 = vpop.f32.mrf.mxu0
    %v489 = vadd.f32 0.0, %v488
    %v490 = vpop.f32.mrf.mxu0
    %491 = vdwg.mxu0
    %492 = vmatpush.bf16.msra.mxu0 0
    %493 = vmatpush.bf16.msra.mxu0 0
    %494 = vmatpush.bf16.msra.mxu0 0
    %495 = vmatpush.bf16.msra.mxu0 0
    %496 = vmatpush.bf16.msra.mxu0 %v322
    %497 = vmatpush.bf16.msra.mxu0 %v308
    %498 = vmatpush.bf16.msra.mxu0 %v294
    %499 = vmatpush.bf16.msra.mxu0 %v280
    %500 = vmatmul.bf16.gmra.mxu0 %v386
    %v501 = vpop.f32.mrf.mxu0
    %v502 = vadd.f32 0.0, %v501
    %v503 = vpop.f32.mrf.mxu0
    %504 = vdwg.mxu0
    %505 = vmatpush.bf16.msra.mxu0 0
    %506 = vmatpush.bf16.msra.mxu0 0
    %507 = vmatpush.bf16.msra.mxu0 0
    %508 = vmatpush.bf16.msra.mxu0 0
    %509 = vmatpush.bf16.msra.mxu0 %v323
    %510 = vmatpush.bf16.msra.mxu0 %v309
    %511 = vmatpush.bf16.msra.mxu0 %v295
    %512 = vmatpush.bf16.msra.mxu0 %v281
    %513 = vmatmul.bf16.gmra.mxu0 %v386
    %v514 = vpop.f32.mrf.mxu0
    %v515 = vadd.f32 0.0, %v514
    %v516 = vpop.f32.mrf.mxu0
    %517 = vdwg.mxu0
    %518 = vmatpush.bf16.msra.mxu0 0
    %519 = vmatpush.bf16.msra.mxu0 0
    %520 = vmatpush.bf16.msra.mxu0 0
    %521 = vmatpush.bf16.msra.mxu0 0
    %522 = vmatpush.bf16.msra.mxu0 %v324
    %523 = vmatpush.bf16.msra.mxu0 %v310
    %524 = vmatpush.bf16.msra.mxu0 %v296
    %525 = vmatpush.bf16.msra.mxu0 %v282
    %526 = vmatmul.bf16.gmra.mxu0 %v386
    %v527 = vpop.f32.mrf.mxu0
    %v528 = vadd.f32 0.0, %v527
    %v529 = vpop.f32.mrf.mxu0
    %530 = vdwg.mxu0
    %531 = vmatpush.bf16.msra.mxu0 0
    %532 = vmatpush.bf16.msra.mxu0 0
    %533 = vmatpush.bf16.msra.mxu0 0
    %534 = vmatpush.bf16.msra.mxu0 0
    %535 = vmatpush.bf16.msra.mxu0 %v325
    %536 = vmatpush.bf16.msra.mxu0 %v311
    %537 = vmatpush.bf16.msra.mxu0 %v297
    %538 = vmatpush.bf16.msra.mxu0 %v283
    %539 = vmatmul.bf16.gmra.mxu0 %v386
    %v540 = vpop.f32.mrf.mxu0
    %v541 = vadd.f32 0.0, %v540
    %v542 = vpop.f32.mrf.mxu0
    %543 = vdwg.mxu0
    %544 = vmatpush.bf16.msra.mxu0 0
    %545 = vmatpush.bf16.msra.mxu0 0
    %546 = vmatpush.bf16.msra.mxu0 0
    %547 = vmatpush.bf16.msra.mxu0 0
    %548 = vmatpush.bf16.msra.mxu0 %v326
    %549 = vmatpush.bf16.msra.mxu0 %v312
    %550 = vmatpush.bf16.msra.mxu0 %v298
    %551 = vmatpush.bf16.msra.mxu0 %v284
    %552 = vmatmul.bf16.gmra.mxu0 %v386
    %v553 = vpop.f32.mrf.mxu0
    %v554 = vadd.f32 0.0, %v553
    %v555 = vpop.f32.mrf.mxu0
    %556 = vdwg.mxu0
    %557 = vmatpush.bf16.msra.mxu0 0
    %558 = vmatpush.bf16.msra.mxu0 0
    %559 = vmatpush.bf16.msra.mxu0 0
    %560 = vmatpush.bf16.msra.mxu0 0
    %561 = vmatpush.bf16.msra.mxu0 %v327
    %562 = vmatpush.bf16.msra.mxu0 %v313
    %563 = vmatpush.bf16.msra.mxu0 %v299
    %564 = vmatpush.bf16.msra.mxu0 %v285
    %565 = vmatmul.bf16.gmra.mxu0 %v386
    %v566 = vpop.f32.mrf.mxu0
    %v567 = vadd.f32 0.0, %v566
    %v568 = vpop.f32.mrf.mxu0
    %569 = vdwg.mxu0
    %v570 = vmax.f32 %v398, %v411
    %v571 = vmax.f32 %v570, %v424
    %v572 = vmax.f32 %v571, %v437
    %v573 = vmax.f32 %v572, %v450
    %v574 = vmax.f32 %v573, %v463
    %v575 = vmax.f32 %v574, %v476
    %v576 = vmax.f32 %v575, %v489
    %v577 = vmax.f32 %v576, %v502
    %v578 = vmax.f32 %v577, %v515
    %v579 = vmax.f32 %v578, %v528
    %v580 = vmax.f32 %v579, %v541
    %v581 = vmax.f32 %v580, %v554
    %v582 = vmax.f32 %v581, %v567
    %v583 = vld [vmem:[%s2] sm:$0x1]
    %v585 = vperm.slane %v583, 0
    %v587 = vadd.f32 %v582, %v585
    %v588 = vmax.f32 %v587, 0.0
    %589 = vst [vmem:[#allocation7] sm:$0x3] %v588
    // Predicated region
    $region22: #{tpu_custom_call.1} parent=1 // pred_check
      _
    $region23: #{tpu_custom_call.1} parent=1 // pred_check_branch
      %591 = sbr.rel (0) target = $region25
    $region24: #{tpu_custom_call.1} parent=1 // pred_region
      %593 = vsyncadd [#allocation4], 0
      %s595 = sshll.u32 [#allocation7], 4
      %s596 = int_to_ptr.vmem [resolvable:$true] %s595
      %s597 = sshll.u32 %s3, 4
      %s598 = int_to_ptr.hbm [resolvable:$true] %s597
      %600 = dma.vmem_to_hbm [thread:$0]  %s596, 32, %s598, [#allocation4]
    $region25: #{tpu_custom_call.1} parent=1 // pred_fallthru
      _
    // Predicated region
    $region26: #{tpu_custom_call.1} parent=1 // pred_check
      _
    $region27: #{tpu_custom_call.1} parent=1 // pred_check_branch
      %602 = sbr.rel (0) target = $region29
    $region28: #{tpu_custom_call.1} parent=1 // pred_region
      %604 = dma.done [#allocation4], 32
    $region29: #{tpu_custom_call.1} parent=1 // pred_fallthru
      _
    %605 = vsyncpa [#allocation3], 1
    %606 = vsyncpa [#allocation6], 1
    %607 = vsyncpa [#allocation4], 1

</llo_original>
